<compile_context>
chip_gen: v7x
topology: tpu7x:2x2x1
jax: 0.10.0
libtpu: 0.0.40
codegen_flags: <defaults>
</compile_context>

<pallas_src>
import functools

import jax
import jax.numpy as jnp
from jax.experimental import pallas as pl
from jax.experimental.pallas import tpu as pltpu


def _round_up(x: int, m: int) -> int:
    return ((x + m - 1) // m) * m


def _apply_activation(y, name: str):
    if name == "relu":
        return jnp.maximum(y, 0.0)
    if name == "tanh":
        return jnp.tanh(y)
    if name == "sigmoid":
        return jax.nn.sigmoid(y)
    if name == "identity":
        return y
    # PyTorch module falls back to ReLU for unknown names
    return jnp.maximum(y, 0.0)


# ---------------------------------------------------------------------------
# Feature probe: single-buffered (Buffered(1)) constant-index parameter blocks.
# Run once; fall back to default double-buffering if unsupported.
# ---------------------------------------------------------------------------
_BUFFERED1_SUPPORTED = None


def _buffered1_supported() -> bool:
    global _BUFFERED1_SUPPORTED
    if _BUFFERED1_SUPPORTED is not None:
        return _BUFFERED1_SUPPORTED
    ok = False
    if hasattr(pl, "Buffered"):
        try:
            def _probe_kernel(a_ref, c_ref, o_ref):
                o_ref[...] = a_ref[...] + c_ref[...]

            a = jnp.zeros((16, 128), jnp.float32)
            c = jnp.ones((8, 128), jnp.float32)
            out = pl.pallas_call(
                _probe_kernel,
                out_shape=jax.ShapeDtypeStruct((16, 128), jnp.float32),
                grid=(2,),
                in_specs=[
                    pl.BlockSpec((8, 128), lambda i: (i, 0)),
                    pl.BlockSpec((8, 128), lambda i: (0, 0),
                                 pipeline_mode=pl.Buffered(buffer_count=1)),
                ],
                out_specs=pl.BlockSpec((8, 128), lambda i: (i, 0)),
            )(a, c)
            jax.block_until_ready(out)
            ok = bool(jnp.all(out == 1.0))
        except Exception:
            ok = False
    _BUFFERED1_SUPPORTED = ok
    return ok


# ---------------------------------------------------------------------------
# Pallas kernel: fused multi-layer  h = act_L(... act_0(x @ W0 + b0) ... @ WL + bL)
# ---------------------------------------------------------------------------
def _fused_mlp_kernel(*refs, activations, out_dims_pad):
    # refs = (x_ref, w0_ref, ..., w{L-1}_ref, bias_stack_ref, o_ref)
    x_ref = refs[0]
    bias_ref = refs[-2]
    o_ref = refs[-1]
    w_refs = refs[1:-2]

    h = x_ref[...].astype(jnp.float32)                # (bm, d_in) f32
    for li, act in enumerate(activations):
        pout = out_dims_pad[li]
        w = w_refs[li][...]                           # bf16 (pin, pout)
        b = bias_ref[li:li + 1, :pout]                # f32  (1, pout)
        # bf16 operands into the MXU, f32 accumulation; bias + activation in f32.
        y = jnp.dot(h.astype(jnp.bfloat16), w,
                    preferred_element_type=jnp.float32) + b
        h = _apply_activation(y, act)
        # TODO(synk): for layer widths > ~512 lanes with bm >= 256, tile dout here
        # (or carry h in bf16) so the live activation doesn't spill to VMEM.
    o_ref[...] = h.astype(o_ref.dtype)


# ---------------------------------------------------------------------------
# DynamicNet equivalent
# ---------------------------------------------------------------------------
class DynamicNetPallas:
    def __init__(self, hidden_dims, activations=None, *, key=None):
        self.hidden_dims = list(hidden_dims)
        n_layers = len(self.hidden_dims) - 1
        acts = activations or (["relu"] * (len(self.hidden_dims) - 2) + ["identity"])
        # Layers beyond the provided list get identity (no activation appended),
        # unknown names fall back to ReLU -- mirrors the PyTorch construction.
        self.activations = tuple(
            (acts[i].lower() if i < len(acts) else "identity") for i in range(n_layers)
        )

        key = key if key is not None else jax.random.PRNGKey(0)

        # Unpadded f32 params (used by the pure-JAX reference).
        self.params = []
        for i in range(n_layers):
            d_in, d_out = self.hidden_dims[i], self.hidden_dims[i + 1]
            key, kw, kb = jax.random.split(key, 3)
            bound = 1.0 / (d_in ** 0.5)  # nn.Linear default U(-1/sqrt(fan_in), +)
            w = jax.random.uniform(kw, (d_in, d_out), jnp.float32, -bound, bound)
            b = jax.random.uniform(kb, (d_out,), jnp.float32, -bound, bound)
            self.params.append((w, b))

        # Padded dims: layer-0 input dim stays UNPADDED (block dim == full array
        # dim is always legal), every other feature dim is padded to 128 once.
        self._in_dims = [self.hidden_dims[0]] + [
            _round_up(d, 128) for d in self.hidden_dims[1:-1]
        ]
        self._out_dims_pad = [_round_up(d, 128) for d in self.hidden_dims[1:]]
        max_pout = max(self._out_dims_pad)

        # bf16 padded weights + one stacked f32 bias array (built ONCE).
        padded_ws = []
        b_stacked = jnp.zeros((n_layers, max_pout), jnp.float32)
        for i, (w, b) in enumerate(self.params):
            pin, pout = self._in_dims[i], self._out_dims_pad[i]
            w_pad = (jnp.zeros((pin, pout), jnp.float32)
                     .at[: w.shape[0], : w.shape[1]].set(w)
                     .astype(jnp.bfloat16))
            padded_ws.append(w_pad)
            b_stacked = b_stacked.at[i, : b.shape[0]].set(b)
        self._padded_ws = padded_ws
        self._b_stacked = b_stacked

        # Constant-index parameter blocks never get re-fetched across grid steps:
        # single-buffer them if this Pallas supports Buffered(1).
        self._buffered1 = _buffered1_supported()

        # One jitted forward: (optional batch pad) -> fused pallas_call -> slice.
        self._forward_jit = jax.jit(self._forward_impl)

    # -- BlockSpec for a block that is identical for every grid step ---------
    def _const_spec(self, block_shape):
        index_map = lambda i: (0,) * len(block_shape)
        if self._buffered1:
            return pl.BlockSpec(block_shape, index_map,
                                pipeline_mode=pl.Buffered(buffer_count=1))
        return pl.BlockSpec(block_shape, index_map)

    # -- fused forward (traced under jit; shapes are static per trace) -------
    def _forward_impl(self, x, padded_ws, b_stacked):
        B, d_in = x.shape
        n_layers = len(self.activations)
        dL = self.hidden_dims[-1]
        dL_pad = self._out_dims_pad[-1]

        x = x.astype(jnp.float32)

        # Batch tiling: small batches use ONE full-array block (no padding copy);
        # large batches use 512-row tiles (~85% of measured HBM roofline), which
        # also gives >= 2 "parallel" grid steps to feed both v7x TensorCores.
        if B <= 512:
            bm, B_pad, x_in = B, B, x
        else:
            bm = 512
            B_pad = _round_up(B, bm)
            x_in = jnp.pad(x, ((0, B_pad - B), (0, 0))) if B_pad != B else x
        grid = (B_pad // bm,)

        in_specs = [pl.BlockSpec((bm, d_in), lambda i: (i, 0))]
        flat_inputs = [x_in]
        for li in range(n_layers):
            pin, pout = self._in_dims[li], self._out_dims_pad[li]
            in_specs.append(self._const_spec((pin, pout)))
            flat_inputs.append(padded_ws[li])
        in_specs.append(self._const_spec(tuple(b_stacked.shape)))
        flat_inputs.append(b_stacked)

        # VMEM budget from actual buffer sizes (+2x headroom), capped at 64 MiB
        # so it is valid on v7x; never below 16 MiB.
        w_mult = 1 if self._buffered1 else 2
        w_bytes = sum(self._in_dims[i] * self._out_dims_pad[i] * 2
                      for i in range(n_layers)) * w_mult
        b_bytes = _round_up(n_layers, 8) * b_stacked.shape[1] * 4 * w_mult
        io_bytes = 2 * bm * d_in * 4 + 2 * bm * dL_pad * 4
        act_bytes = 3 * bm * max(self._out_dims_pad + [d_in]) * 4
        need = w_bytes + b_bytes + io_bytes + act_bytes
        vmem_limit = int(min(64 * 2 ** 20, max(16 * 2 ** 20, 2 * need + (2 << 20))))

        kernel = functools.partial(
            _fused_mlp_kernel,
            activations=self.activations,
            out_dims_pad=tuple(self._out_dims_pad),
        )

        # TODO(synk): when sum(padded bf16 weights) approaches ~16-24 MiB, switch
        # weights to memory_space=pl.ANY + pltpu.emit_pipeline so layer i+1's
        # weight DMA hides under layer i's matmul instead of keeping all layers
        # resident (required to fit v7x's 64 MiB VMEM for large nets).
        out_pad = pl.pallas_call(
            kernel,
            out_shape=jax.ShapeDtypeStruct((B_pad, dL_pad), jnp.float32),
            grid=grid,
            in_specs=in_specs,
            out_specs=pl.BlockSpec((bm, dL_pad), lambda i: (i, 0)),
            compiler_params=pltpu.CompilerParams(
                dimension_semantics=("parallel",),
                vmem_limit_bytes=vmem_limit,
            ),
        )(*flat_inputs)

        return out_pad[:B, :dL]

    def forward(self, x):
        x = jnp.asarray(x, dtype=jnp.float32)  # matches torch.tensor(x, float32)
        return self._forward_jit(x, self._padded_ws, self._b_stacked)

    # Pure-JAX f32 reference for validation (unpadded params, same semantics).
    def forward_ref(self, x):
        x = jnp.asarray(x, dtype=jnp.float32)
        for i, (w, b) in enumerate(self.params):
            x = _apply_activation(x @ w + b, self.activations[i])
        return x


if __name__ == "__main__":
    key = jax.random.PRNGKey(0)
    k_x, k_params = jax.random.split(key)

    hidden_dims = [32, 64, 64, 16]          # in=32, hidden=64,64, out=16
    batch = 8
    x = jax.random.normal(k_x, (batch, hidden_dims[0]), dtype=jnp.float32)

    net = DynamicNetPallas(hidden_dims, key=k_params)

    out = jax.block_until_ready(net.forward(x))

    ref = net.forward_ref(x)
    assert out.shape == (batch, hidden_dims[-1])
    # bf16 weights/operands in the kernel vs f32 reference -> loosened tolerance.
    assert jnp.allclose(out, ref, atol=3e-2, rtol=3e-2), float(
        jnp.max(jnp.abs(out - ref)))

    print("KERNEL_OK")
</pallas_src>

<mosaic_0001>
module attributes {stable_mosaic.version = 11 : i64} {
  func.func @_probe_kernel(%arg0: i32, %arg1: memref<8x128xf32, #tpu.memory_space<vmem>>, %arg2: memref<8x128xf32, #tpu.memory_space<vmem>>, %arg3: memref<8x128xf32, #tpu.memory_space<vmem>>) attributes {dimension_semantics = [#tpu.dimension_semantics<arbitrary>], iteration_bounds = array<i64: 2>, scalar_prefetch = 0 : i64, scratch_operands = 0 : i64, tpu.core_type = #tpu.core_type<tc>, window_params = [{transform_indices = @transform_0, window_bounds = array<i64: 8, 128>}, {pipeline_mode = #tpu.pipeline_mode<synchronous>, transform_indices = @transform_1, window_bounds = array<i64: 8, 128>}, {transform_indices = @transform_2, window_bounds = array<i64: 8, 128>}]} {
    %c0 = arith.constant 0 : index
    %c0_0 = arith.constant 0 : index
    %0 = vector.load %arg1[%c0, %c0_0] : memref<8x128xf32, #tpu.memory_space<vmem>>, vector<8x128xf32>
    %c0_1 = arith.constant 0 : index
    %c0_2 = arith.constant 0 : index
    %1 = vector.load %arg2[%c0_1, %c0_2] : memref<8x128xf32, #tpu.memory_space<vmem>>, vector<8x128xf32>
    %2 = arith.addf %0, %1 : vector<8x128xf32>
    %c0_3 = arith.constant 0 : index
    %c0_4 = arith.constant 0 : index
    %3 = vector.load %arg3[%c0_3, %c0_4] : memref<8x128xf32, #tpu.memory_space<vmem>>, vector<8x128xf32>
    tpu.vector_store %arg3[%c0_3, %c0_4], %2 {strides = array<i32>} : memref<8x128xf32, #tpu.memory_space<vmem>>, vector<8x128xf32>,
    return
  }
  func.func @transform_0(%arg0: i32) -> (i32, i32) {
    %c0_i32 = arith.constant 0 : i32
    %c0_i32_0 = arith.constant 0 : i32
    return %arg0, %c0_i32 : i32, i32
  }
  func.func @transform_1(%arg0: i32) -> (i32, i32) {
    %c0_i32 = arith.constant 0 : i32
    %c0_i32_0 = arith.constant 0 : i32
    %c0_i32_1 = arith.constant 0 : i32
    return %c0_i32, %c0_i32_0 : i32, i32
  }
  func.func @transform_2(%arg0: i32) -> (i32, i32) {
    %c0_i32 = arith.constant 0 : i32
    %c0_i32_0 = arith.constant 0 : i32
    return %arg0, %c0_i32 : i32, i32
  }
}

module attributes {stable_mosaic.version = 11 : i64} {
  func.func @_fused_mlp_kernel(%arg0: i32, %arg1: memref<8x32xf32, #tpu.memory_space<vmem>>, %arg2: memref<32x128xbf16, #tpu.memory_space<vmem>>, %arg3: memref<128x128xbf16, #tpu.memory_space<vmem>>, %arg4: memref<128x128xbf16, #tpu.memory_space<vmem>>, %arg5: memref<3x128xf32, #tpu.memory_space<vmem>>, %arg6: memref<8x128xf32, #tpu.memory_space<vmem>>) attributes {dimension_semantics = [#tpu.dimension_semantics<parallel>], iteration_bounds = array<i64: 1>, scalar_prefetch = 0 : i64, scratch_operands = 0 : i64, tpu.core_type = #tpu.core_type<tc>, window_params = [{transform_indices = @transform_0, window_bounds = array<i64: 8, 32>}, {pipeline_mode = #tpu.pipeline_mode<synchronous>, transform_indices = @transform_1, window_bounds = array<i64: 32, 128>}, {pipeline_mode = #tpu.pipeline_mode<synchronous>, transform_indices = @transform_2, window_bounds = array<i64: 128, 128>}, {pipeline_mode = #tpu.pipeline_mode<synchronous>, transform_indices = @transform_3, window_bounds = array<i64: 128, 128>}, {pipeline_mode = #tpu.pipeline_mode<synchronous>, transform_indices = @transform_4, window_bounds = array<i64: 3, 128>}, {transform_indices = @transform_5, window_bounds = array<i64: 8, 128>}]} {
    %c0 = arith.constant 0 : index
    %c0_0 = arith.constant 0 : index
    %0 = vector.load %arg1[%c0, %c0_0] : memref<8x32xf32, #tpu.memory_space<vmem>>, vector<8x32xf32>
    %c0_1 = arith.constant 0 : index
    %c0_2 = arith.constant 0 : index
    %1 = vector.load %arg2[%c0_1, %c0_2] : memref<32x128xbf16, #tpu.memory_space<vmem>>, vector<32x128xbf16>
    %c0_3 = arith.constant 0 : index
    %c0_4 = arith.constant 0 : index
    %2 = vector.load %arg5[%c0_3, %c0_4] : memref<3x128xf32, #tpu.memory_space<vmem>>, vector<1x128xf32>
    %3 = arith.truncf %0 : vector<8x32xf32> to vector<8x32xbf16>
    %cst = arith.constant dense<0.000000e+00> : vector<8x128xf32>
    %4 = tpu.matmul %3, %1, %cst {dimension_numbers = #tpu.dot_dimension_numbers<[1], [0], [0], [1], [0, 0, 1, 1], [], []>} : vector<8x32xbf16>, vector<32x128xbf16>, vector<8x128xf32> -> vector<8x128xf32>
    %5 = vector.broadcast %2 : vector<1x128xf32> to vector<8x128xf32>
    %6 = arith.addf %4, %5 : vector<8x128xf32>
    %cst_5 = arith.constant 0.000000e+00 : f32
    %7 = vector.broadcast %cst_5 : f32 to vector<8x128xf32>
    %8 = arith.maximumf %6, %7 : vector<8x128xf32>
    %c0_6 = arith.constant 0 : index
    %c0_7 = arith.constant 0 : index
    %9 = vector.load %arg3[%c0_6, %c0_7] : memref<128x128xbf16, #tpu.memory_space<vmem>>, vector<128x128xbf16>
    %c1 = arith.constant 1 : index
    %c0_8 = arith.constant 0 : index
    %10 = vector.load %arg5[%c1, %c0_8] : memref<3x128xf32, #tpu.memory_space<vmem>>, vector<1x128xf32>
    %11 = arith.truncf %8 : vector<8x128xf32> to vector<8x128xbf16>
    %cst_9 = arith.constant dense<0.000000e+00> : vector<8x128xf32>
    %12 = tpu.matmul %11, %9, %cst_9 {dimension_numbers = #tpu.dot_dimension_numbers<[1], [0], [0], [1], [0, 0, 1, 1], [], []>} : vector<8x128xbf16>, vector<128x128xbf16>, vector<8x128xf32> -> vector<8x128xf32>
    %13 = vector.broadcast %10 : vector<1x128xf32> to vector<8x128xf32>
    %14 = arith.addf %12, %13 : vector<8x128xf32>
    %cst_10 = arith.constant 0.000000e+00 : f32
    %15 = vector.broadcast %cst_10 : f32 to vector<8x128xf32>
    %16 = arith.maximumf %14, %15 : vector<8x128xf32>
    %c0_11 = arith.constant 0 : index
    %c0_12 = arith.constant 0 : index
    %17 = vector.load %arg4[%c0_11, %c0_12] : memref<128x128xbf16, #tpu.memory_space<vmem>>, vector<128x128xbf16>
    %c2 = arith.constant 2 : index
    %c0_13 = arith.constant 0 : index
    %18 = vector.load %arg5[%c2, %c0_13] : memref<3x128xf32, #tpu.memory_space<vmem>>, vector<1x128xf32>
    %19 = arith.truncf %16 : vector<8x128xf32> to vector<8x128xbf16>
    %cst_14 = arith.constant dense<0.000000e+00> : vector<8x128xf32>
    %20 = tpu.matmul %19, %17, %cst_14 {dimension_numbers = #tpu.dot_dimension_numbers<[1], [0], [0], [1], [0, 0, 1, 1], [], []>} : vector<8x128xbf16>, vector<128x128xbf16>, vector<8x128xf32> -> vector<8x128xf32>
    %21 = vector.broadcast %18 : vector<1x128xf32> to vector<8x128xf32>
    %22 = arith.addf %20, %21 : vector<8x128xf32>
    %c0_15 = arith.constant 0 : index
    %c0_16 = arith.constant 0 : index
    %23 = vector.load %arg6[%c0_15, %c0_16] : memref<8x128xf32, #tpu.memory_space<vmem>>, vector<8x128xf32>
    tpu.vector_store %arg6[%c0_15, %c0_16], %22 {strides = array<i32>} : memref<8x128xf32, #tpu.memory_space<vmem>>, vector<8x128xf32>,
    return
  }
  func.func @transform_0(%arg0: i32) -> (i32, i32) {
    %c0_i32 = arith.constant 0 : i32
    %c0_i32_0 = arith.constant 0 : i32
    return %arg0, %c0_i32 : i32, i32
  }
  func.func @transform_1(%arg0: i32) -> (i32, i32) {
    %c0_i32 = arith.constant 0 : i32
    %c0_i32_0 = arith.constant 0 : i32
    %c0_i32_1 = arith.constant 0 : i32
    return %c0_i32, %c0_i32_0 : i32, i32
  }
  func.func @transform_2(%arg0: i32) -> (i32, i32) {
    %c0_i32 = arith.constant 0 : i32
    %c0_i32_0 = arith.constant 0 : i32
    %c0_i32_1 = arith.constant 0 : i32
    return %c0_i32, %c0_i32_0 : i32, i32
  }
  func.func @transform_3(%arg0: i32) -> (i32, i32) {
    %c0_i32 = arith.constant 0 : i32
    %c0_i32_0 = arith.constant 0 : i32
    %c0_i32_1 = arith.constant 0 : i32
    return %c0_i32, %c0_i32_0 : i32, i32
  }
  func.func @transform_4(%arg0: i32) -> (i32, i32) {
    %c0_i32 = arith.constant 0 : i32
    %c0_i32_0 = arith.constant 0 : i32
    %c0_i32_1 = arith.constant 0 : i32
    return %c0_i32, %c0_i32_0 : i32, i32
  }
  func.func @transform_5(%arg0: i32) -> (i32, i32) {
    %c0_i32 = arith.constant 0 : i32
    %c0_i32_0 = arith.constant 0 : i32
    return %arg0, %c0_i32 : i32, i32
  }
}

</mosaic_0001>

<llo_original>
// kernel: tpu_custom_call.1
$region0: #{tpu_custom_call.1}
  #allocation0 [shape = 'u32[]', space=smem, size = 0x4, offset = 0x4, fixed_abs, tag = 'smem constant byte address 0x4 - core index']
  #allocation1 [shape = 'u32[144,128]{1,0:T(1,128)}', space=vmem, size = 0x12000, scoped, tag = 'internal scratch']
  %s0 = inlined_call_operand.hbm [shape: f32[16,128], index: 0, kind: input, shape index: {}]
  %s1 = inlined_call_operand.hbm [shape: f32[8,128], index: 1, kind: input, shape index: {}]
  %s2 = inlined_call_operand.hbm [shape: f32[16,128], index: 2, kind: output, shape index: {}]
  %s3 = sld [smem:[#allocation0]]
  $region49: #{tpu_custom_call.1} parent=0
    _
  %s5 = ssub.s32 1, %s3
  %s6 = scalar_select 0, %s5, %s3
  $region1: #{tpu_custom_call.1} parent=0
    #allocation2 [shape = 'u8[8192]{0}', space=vmem, size = 0x2000, scoped, tag = 'input window, operand 0']
    #allocation3 [shape = 's32[2]{0}', space=sflag, size = 0x8, scoped, tag = 'scoped memory for tpu_custom_call.1']
    #allocation4 [shape = 's32[2]{0}', space=sflag, size = 0x8, scoped, tag = 'scoped memory for tpu_custom_call.1']
    #allocation5 [shape = 'u8[4096]{0}', space=vmem, size = 0x1000, scoped, tag = 'input window, operand 1, single buffered']
    #allocation6 [shape = 's32[1]{0}', space=sflag, size = 0x4, scoped, tag = 'scoped memory for tpu_custom_call.1']
    #allocation7 [shape = 'u8[8192]{0}', space=vmem, size = 0x2000, scoped, tag = 'output window, operand 0']
    %7 = vsyncpa [#allocation3], 0
    %s8 = scalar_lea.sflag [#allocation3], 1
    %9 = vsyncpa %s8, 0
    %10 = vsyncpa [#allocation6], 0
    %11 = vsyncpa [#allocation4], 0
    %s12 = scalar_lea.sflag [#allocation4], 1
    %13 = vsyncpa %s12, 0
    loop: start=0, step=1, limit=4
    $region2: #{tpu_custom_call.1} parent=1 // loop_pre_header
      _
    $region3: #{tpu_custom_call.1} parent=1 // loop_header
      %s15 = sphi 0, %s19
      %p16 = scmp.ge.s32.totalorder %s15, 4
      %s25 = sphi 0, %s27
      %s28 = sphi 0, %s25
      %s29 = sphi 0, %s28
      %s45 = sphi 0, %s29
      %s49 = sphi 0, %s49
      %s51 = sphi 0, %s49
      %s52 = sphi 0, %s51
      %s66 = sphi 0, %s52
      %s72 = sphi 0, %s74
      %s75 = sphi 0, %s72
      %s76 = sphi 0, %s75
      %s92 = sphi 0, %s76
    $region4: #{tpu_custom_call.1} parent=1 // loop_header_branch
      %18 = sbr.rel (%p16) target = $region8
    $region5: #{tpu_custom_call.1} parent=1 // loop_body
      %s20 = ssub.s32 %s15, 1
      %s21 = ssub.s32 %s15, 2
      %s22 = sadd.s32 %s15, 1
      %s23 = ssub.s32 %s15, %s22
      %p24 = scmp.eq.s32.totalorder %s23, 0
      %s26 = sadd.s32 %s25, 1
      %s27 = scalar_select %p24, %s25, %s26
      %p30 = pneg %p24
      %p31 = scmp.eq.s32.totalorder %s15, 1
      %p32 = por %p30, %p31
      %p33 = scmp.ne.s32.totalorder %s25, %s28
      %p34 = scmp.eq.s32.totalorder %s15, 0
      %p35 = por %p33, %p34
      %p36 = scmp.ne.s32.totalorder %s25, %s28
      %p37 = scmp.eq.s32.totalorder %s20, 1
      %p38 = por %p36, %p37
      %p39 = scmp.ne.s32.totalorder %s28, %s29
      %p40 = scmp.eq.s32.totalorder %s20, 0
      %p41 = por %p39, %p40
      %p42 = scmp.ne.s32.totalorder %s28, %s29
      %p43 = scmp.eq.s32.totalorder %s21, 1
      %p44 = por %p42, %p43
      %p46 = scmp.ne.s32.totalorder %s29, %s45
      %p47 = scmp.eq.s32.totalorder %s21, 0
      %p48 = por %p46, %p47
      %s50 = sadd.s32 %s49, 1
      %p53 = scmp.eq.s32.totalorder %s15, 1
      %p54 = scmp.ne.s32.totalorder %s49, %s51
      %p55 = scmp.eq.s32.totalorder %s15, 0
      %p56 = por %p54, %p55
      %p57 = scmp.ne.s32.totalorder %s49, %s51
      %p58 = scmp.eq.s32.totalorder %s20, 1
      %p59 = por %p57, %p58
      %p60 = scmp.ne.s32.totalorder %s51, %s52
      %p61 = scmp.eq.s32.totalorder %s20, 0
      %p62 = por %p60, %p61
      %p63 = scmp.ne.s32.totalorder %s51, %s52
      %p64 = scmp.eq.s32.totalorder %s21, 1
      %p65 = por %p63, %p64
      %p67 = scmp.ne.s32.totalorder %s52, %s66
      %p68 = scmp.eq.s32.totalorder %s21, 0
      %p69 = por %p67, %p68
      %s70 = ssub.s32 %s15, %s22
      %p71 = scmp.eq.s32.totalorder %s70, 0
      %s73 = sadd.s32 %s72, 1
      %s74 = scalar_select %p71, %s72, %s73
      %p77 = pneg %p71
      %p78 = scmp.eq.s32.totalorder %s15, 1
      %p79 = por %p77, %p78
      %p80 = scmp.ne.s32.totalorder %s72, %s75
      %p81 = scmp.eq.s32.totalorder %s15, 0
      %p82 = por %p80, %p81
      %p83 = scmp.ne.s32.totalorder %s72, %s75
      %p84 = scmp.eq.s32.totalorder %s20, 1
      %p85 = por %p83, %p84
      %p86 = scmp.ne.s32.totalorder %s75, %s76
      %p87 = scmp.eq.s32.totalorder %s20, 0
      %p88 = por %p86, %p87
      %p89 = scmp.ne.s32.totalorder %s75, %s76
      %p90 = scmp.eq.s32.totalorder %s21, 1
      %p91 = por %p89, %p90
      %p93 = scmp.ne.s32.totalorder %s76, %s92
      %p94 = scmp.eq.s32.totalorder %s21, 0
      %p95 = por %p93, %p94
      %p96 = scmp.le.s32.totalorder 1, %s15
      %p97 = scmp.lt.s32.totalorder %s15, 3
      %p98 = pnand %p96, %p97
      %p99 = pneg %p98
      // Predicated region
      $region9: #{tpu_custom_call.1} parent=5 // pred_check
        _
      $region10: #{tpu_custom_call.1} parent=5 // pred_check_branch
        %101 = sbr.rel (%p98) target = $region12
      $region11: #{tpu_custom_call.1} parent=5 // pred_region
        %s102 = ssub.s32 %s15, 1
        // Predicated region
        $region13: #{tpu_custom_call.1} parent=11 // pred_check
          %p103 = pneg %p62
        $region14: #{tpu_custom_call.1} parent=11 // pred_check_branch
          %105 = sbr.rel (%p103) target = $region16
        $region15: #{tpu_custom_call.1} parent=11 // pred_region
          %s107 = ssub.s32 128, 128
          %108 = vsyncadd [#allocation6], %s107
          %s110 = sshll.u32 [#allocation5], 4
          %s111 = int_to_ptr.vmem [resolvable:$true] %s110
          %113 = dma.hbm_to_vmem [thread:$0]  %s1, 128, %s111, [#allocation6]
        $region16: #{tpu_custom_call.1} parent=11 // pred_fallthru
          _
      $region12: #{tpu_custom_call.1} parent=5 // pred_fallthru
        _
      %p114 = scmp.lt.s32.totalorder %s15, 2
      // Predicated region
      $region17: #{tpu_custom_call.1} parent=5 // pred_check
        %p115 = pneg %p114
      $region18: #{tpu_custom_call.1} parent=5 // pred_check_branch
        %117 = sbr.rel (%p115) target = $region20
      $region19: #{tpu_custom_call.1} parent=5 // pred_region
        // Predicated region
        $region21: #{tpu_custom_call.1} parent=19 // pred_check
          %p118 = pneg %p35
        $region22: #{tpu_custom_call.1} parent=19 // pred_check_branch
          %120 = sbr.rel (%p118) target = $region24
        $region23: #{tpu_custom_call.1} parent=19 // pred_region
          %s121 = sand.u32 %s25, 1
          %s122 = scalar_lea.sflag [#allocation3], %s121
          %s123 = sand.u32 %s25, 1
          %s124 = smul.addr %s123, 8
          %s125 = scalar_lea.vmem [#allocation2], %s124
          %s127 = ssub.s32 128, 128
          %128 = vsyncadd %s122, %s127
          %s129 = smul.addr %s15, 128
          %s130 = scalar_lea.hbm %s0, %s129
          %s132 = sshll.u32 %s125, 4
          %s133 = int_to_ptr.vmem [resolvable:$true] %s132
          %135 = dma.hbm_to_vmem [thread:$0]  %s130, 128, %s133, %s122
        $region24: #{tpu_custom_call.1} parent=19 // pred_fallthru
          _
      $region20: #{tpu_custom_call.1} parent=5 // pred_fallthru
        _
      %p136 = scmp.le.s32.totalorder 1, %s15
      %p137 = scmp.lt.s32.totalorder %s15, 3
      %p138 = pnand %p136, %p137
      %p139 = pneg %p138
      // Predicated region
      $region25: #{tpu_custom_call.1} parent=5 // pred_check
        _
      $region26: #{tpu_custom_call.1} parent=5 // pred_check_branch
        %141 = sbr.rel (%p138) target = $region28
      $region27: #{tpu_custom_call.1} parent=5 // pred_region
        %s142 = ssub.s32 %s15, 1
        %s143 = sand.u32 %s28, 1
        %s144 = scalar_lea.sflag [#allocation3], %s143
        %s145 = sand.u32 %s28, 1
        %s146 = smul.addr %s145, 8
        %s147 = scalar_lea.vmem [#allocation2], %s146
        // Predicated region
        $region29: #{tpu_custom_call.1} parent=27 // pred_check
          %p148 = pneg %p41
        $region30: #{tpu_custom_call.1} parent=27 // pred_check_branch
          %150 = sbr.rel (%p148) target = $region32
        $region31: #{tpu_custom_call.1} parent=27 // pred_region
          %151 = dma.done %s144, 128
        $region32: #{tpu_custom_call.1} parent=27 // pred_fallthru
          _
        // Predicated region
        $region33: #{tpu_custom_call.1} parent=27 // pred_check
          %p152 = pneg %p62
        $region34: #{tpu_custom_call.1} parent=27 // pred_check_branch
          %154 = sbr.rel (%p152) target = $region36
        $region35: #{tpu_custom_call.1} parent=27 // pred_region
          %155 = dma.done [#allocation6], 128
        $region36: #{tpu_custom_call.1} parent=27 // pred_fallthru
          _
        %s156 = sand.u32 %s28, 1
        %s157 = scalar_lea.sflag [#allocation3], %s156
        %s158 = sand.u32 %s28, 1
        %s159 = smul.addr %s158, 8
        %s160 = scalar_lea.vmem [#allocation2], %s159
        %p161 = pneg %p41
        %p162 = pneg %p38
        %p163 = pneg %p62
        %p164 = pneg %p59
        %p165 = pneg %p88
        %p166 = pneg %p85
        %s167 = sand.u32 %s75, 1
        %s168 = scalar_lea.sflag [#allocation4], %s167
        %s169 = sand.u32 %s75, 1
        %s170 = smul.addr %s169, 8
        %s171 = scalar_lea.vmem [#allocation7], %s170
        %v172 = vld [vmem:[%s147] sm:$0xff]
        %v173 = vld [vmem:[#allocation5] sm:$0xff]
        %v174 = vadd.f32 %v172, %v173
        %175 = vst [vmem:[%s171] sm:$0xff] %v174
        %s176 = sand.u32 %s75, 1
        %s177 = scalar_lea.sflag [#allocation4], %s176
        %s178 = sand.u32 %s75, 1
        %s179 = smul.addr %s178, 8
        %s180 = scalar_lea.vmem [#allocation7], %s179
        // Predicated region
        $region37: #{tpu_custom_call.1} parent=27 // pred_check
          %p181 = pneg %p85
        $region38: #{tpu_custom_call.1} parent=27 // pred_check_branch
          %183 = sbr.rel (%p181) target = $region40
        $region39: #{tpu_custom_call.1} parent=27 // pred_region
          %s185 = ssub.s32 128, 128
          %186 = vsyncadd %s177, %s185
          %s187 = smul.addr %s20, 128
          %s188 = scalar_lea.hbm %s2, %s187
          %s190 = sshll.u32 %s180, 4
          %s191 = int_to_ptr.vmem [resolvable:$true] %s190
          %193 = dma.vmem_to_hbm [thread:$0]  %s191, 128, %s188, %s177
        $region40: #{tpu_custom_call.1} parent=27 // pred_fallthru
          _
      $region28: #{tpu_custom_call.1} parent=5 // pred_fallthru
        _
      %p194 = scmp.le.s32.totalorder 2, %s15
      // Predicated region
      $region41: #{tpu_custom_call.1} parent=5 // pred_check
        %p195 = pneg %p194
      $region42: #{tpu_custom_call.1} parent=5 // pred_check_branch
        %197 = sbr.rel (%p195) target = $region44
      $region43: #{tpu_custom_call.1} parent=5 // pred_region
        %s198 = ssub.s32 %s15, 2
        // Predicated region
        $region45: #{tpu_custom_call.1} parent=43 // pred_check
          %p199 = pneg %p91
        $region46: #{tpu_custom_call.1} parent=43 // pred_check_branch
          %201 = sbr.rel (%p199) target = $region48
        $region47: #{tpu_custom_call.1} parent=43 // pred_region
          %s202 = sand.u32 %s76, 1
          %s203 = scalar_lea.sflag [#allocation4], %s202
          %s204 = sand.u32 %s76, 1
          %s205 = smul.addr %s204, 8
          %s206 = scalar_lea.vmem [#allocation7], %s205
          %207 = dma.done %s203, 128
        $region48: #{tpu_custom_call.1} parent=43 // pred_fallthru
          _
      $region44: #{tpu_custom_call.1} parent=5 // pred_fallthru
        _
    $region6: #{tpu_custom_call.1} parent=1 // loop_footer
      %s19 = sadd.s32 1, %s15
    $region7: #{tpu_custom_call.1} parent=1 // loop_footer_branch
      %14 = sbr.rel target = $region3
    $region8: #{tpu_custom_call.1} parent=1 // loop_exit
      _
    %208 = vsyncpa [#allocation3], 1
    %s209 = scalar_lea.sflag [#allocation3], 1
    %210 = vsyncpa %s209, 1
    %211 = vsyncpa [#allocation6], 1
    %212 = vsyncpa [#allocation4], 1
    %s213 = scalar_lea.sflag [#allocation4], 1
    %214 = vsyncpa %s213, 1

// kernel: _forward_impl.1
$region0: #{_forward_impl.1}
  #allocation0 [shape = 'u32[]', space=smem, size = 0x4, offset = 0x4, fixed_abs, tag = 'smem constant byte address 0x4 - core index']
  #allocation1 [shape = 'u32[144,128]{1,0:T(1,128)}', space=vmem, size = 0x12000, scoped, tag = 'internal scratch']
  %s0 = inlined_call_operand.hbm [shape: f32[8,32], index: 0, kind: input, shape index: {}]
  %s1 = inlined_call_operand.hbm [shape: bf16[32,128], index: 1, kind: input, shape index: {}]
  %s2 = inlined_call_operand.hbm [shape: bf16[128,128], index: 2, kind: input, shape index: {}]
  %s3 = inlined_call_operand.hbm [shape: bf16[128,128], index: 3, kind: input, shape index: {}]
  %s4 = inlined_call_operand.vmem [shape: f32[3,128], index: 4, kind: input, shape index: {}]
  %s5 = inlined_call_operand.hbm [shape: f32[8,128], index: 5, kind: output, shape index: {}]
  %s6 = sld [smem:[#allocation0]]
  $region46: #{_forward_impl.1} parent=0
    _
  %s8 = ssub.s32 1, %s6
  %s9 = scalar_select 0, %s8, %s6
  $region1: #{_forward_impl.1} parent=0
    #allocation2 [shape = 'u8[4096]{0}', space=vmem, size = 0x1000, scoped, tag = 'input window, operand 0, single buffered']
    #allocation3 [shape = 's32[1]{0}', space=sflag, size = 0x4, scoped, tag = 'scoped memory for _forward_impl.1']
    #allocation4 [shape = 's32[1]{0}', space=sflag, size = 0x4, scoped, tag = 'scoped memory for _forward_impl.1']
    #allocation5 [shape = 'u8[8192]{0}', space=vmem, size = 0x2000, scoped, tag = 'input window, operand 1, single buffered']
    #allocation6 [shape = 's32[1]{0}', space=sflag, size = 0x4, scoped, tag = 'scoped memory for _forward_impl.1']
    #allocation7 [shape = 'u8[32768]{0}', space=vmem, size = 0x8000, scoped, tag = 'input window, operand 2, single buffered']
    #allocation8 [shape = 'u8[32768]{0}', space=vmem, size = 0x8000, scoped, tag = 'input window, operand 3, single buffered']
    #allocation9 [shape = 's32[1]{0}', space=sflag, size = 0x4, scoped, tag = 'scoped memory for _forward_impl.1']
    #allocation10 [shape = 'u8[4096]{0}', space=vmem, size = 0x1000, scoped, tag = 'output window, operand 0, single buffered']
    %10 = vsyncpa [#allocation3], 0
    %11 = vsyncpa [#allocation6], 0
    %12 = vsyncpa [#allocation9], 0
    %13 = vsyncpa [#allocation4], 0
    // Predicated region
    $region2: #{_forward_impl.1} parent=1 // pred_check
      _
    $region3: #{_forward_impl.1} parent=1 // pred_check_branch
      %15 = sbr.rel (0) target = $region5
    $region4: #{_forward_impl.1} parent=1 // pred_region
      %s17 = ssub.s32 128, 128
      %18 = vsyncadd [#allocation3], %s17
      %s20 = sshll.u32 [#allocation2], 4
      %s21 = int_to_ptr.vmem [resolvable:$true] %s20
      %23 = dma.hbm_to_vmem [thread:$0]  %s0, 128, %s21, [#allocation3]
    $region5: #{_forward_impl.1} parent=1 // pred_fallthru
      _
    // Predicated region
    $region6: #{_forward_impl.1} parent=1 // pred_check
      _
    $region7: #{_forward_impl.1} parent=1 // pred_check_branch
      %25 = sbr.rel (0) target = $region9
    $region8: #{_forward_impl.1} parent=1 // pred_region
      %s27 = ssub.s32 256, 256
      %28 = vsyncadd [#allocation6], %s27
      %s29 = sshll.u32 [#allocation5], 4
      %s30 = int_to_ptr.vmem [resolvable:$true] %s29
      %35 = dma.hbm_to_vmem [thread:$0]  %s1, 256, %s30, [#allocation6], 64, 64, 4
    $region9: #{_forward_impl.1} parent=1 // pred_fallthru
      _
    // Predicated region
    $region10: #{_forward_impl.1} parent=1 // pred_check
      _
    $region11: #{_forward_impl.1} parent=1 // pred_check_branch
      %37 = sbr.rel (0) target = $region13
    $region12: #{_forward_impl.1} parent=1 // pred_region
      %s39 = ssub.s32 1024, 1024
      %40 = vsyncadd [#allocation6], %s39
      %s41 = sshll.u32 [#allocation7], 4
      %s42 = int_to_ptr.vmem [resolvable:$true] %s41
      %47 = dma.hbm_to_vmem [thread:$0]  %s2, 1024, %s42, [#allocation6], 64, 64, 4
    $region13: #{_forward_impl.1} parent=1 // pred_fallthru
      _
    // Predicated region
    $region14: #{_forward_impl.1} parent=1 // pred_check
      _
    $region15: #{_forward_impl.1} parent=1 // pred_check_branch
      %49 = sbr.rel (0) target = $region17
    $region16: #{_forward_impl.1} parent=1 // pred_region
      %s51 = ssub.s32 1024, 1024
      %52 = vsyncadd [#allocation9], %s51
      %s53 = sshll.u32 [#allocation8], 4
      %s54 = int_to_ptr.vmem [resolvable:$true] %s53
      %59 = dma.hbm_to_vmem [thread:$0]  %s3, 1024, %s54, [#allocation9], 64, 64, 4
    $region17: #{_forward_impl.1} parent=1 // pred_fallthru
      _
    // Predicated region
    $region18: #{_forward_impl.1} parent=1 // pred_check
      _
    $region19: #{_forward_impl.1} parent=1 // pred_check_branch
      %61 = sbr.rel (0) target = $region21
    $region20: #{_forward_impl.1} parent=1 // pred_region
      _
    $region21: #{_forward_impl.1} parent=1 // pred_fallthru
      _
    // Predicated region
    $region22: #{_forward_impl.1} parent=1 // pred_check
      _
    $region23: #{_forward_impl.1} parent=1 // pred_check_branch
      %63 = sbr.rel (0) target = $region25
    $region24: #{_forward_impl.1} parent=1 // pred_region
      %64 = dma.done [#allocation3], 128
    $region25: #{_forward_impl.1} parent=1 // pred_fallthru
      _
    // Predicated region
    $region26: #{_forward_impl.1} parent=1 // pred_check
      _
    $region27: #{_forward_impl.1} parent=1 // pred_check_branch
      %66 = sbr.rel (0) target = $region29
    $region28: #{_forward_impl.1} parent=1 // pred_region
      %67 = dma.done [#allocation6], 256
    $region29: #{_forward_impl.1} parent=1 // pred_fallthru
      _
    // Predicated region
    $region30: #{_forward_impl.1} parent=1 // pred_check
      _
    $region31: #{_forward_impl.1} parent=1 // pred_check_branch
      %69 = sbr.rel (0) target = $region33
    $region32: #{_forward_impl.1} parent=1 // pred_region
      %70 = dma.done [#allocation6], 1024
    $region33: #{_forward_impl.1} parent=1 // pred_fallthru
      _
    // Predicated region
    $region34: #{_forward_impl.1} parent=1 // pred_check
      _
    $region35: #{_forward_impl.1} parent=1 // pred_check_branch
      %72 = sbr.rel (0) target = $region37
    $region36: #{_forward_impl.1} parent=1 // pred_region
      %73 = dma.done [#allocation9], 1024
    $region37: #{_forward_impl.1} parent=1 // pred_fallthru
      _
    %v75 = vld [vmem:[#allocation2] sm:$0xff]
    %v76 = vld [vmem:[#allocation5] sm:$0xf]
    %v77 = vld [vmem:[#allocation5 + $0x4] sm:$0xf]
    %v78 = vld [vmem:[#allocation5 + $0x8] sm:$0xf]
    %v79 = vld [vmem:[#allocation5 + $0xc] sm:$0xf]
    %v80 = vld [vmem:[%s4] sm:$0x1]
    %v81 = vpack.c.bf16 %v75, %v75
    %v82 = vlaneseq
    %v83 = vshrl.u32 %v82, 7
    %v84 = vsub.s32 0, %v83
    %v85 = vrot.slane %v80, %v84
    %v90 = vunpack.c.l.b16 %v76
    %v91 = vunpack.c.l.b16 %v77
    %v92 = vunpack.c.l.b16 %v78
    %v93 = vunpack.c.l.b16 %v79
    %v94 = vpack.c.b16 %v91, %v90
    %v95 = vpack.c.b16 %v93, %v92
    %vm98 = vcmask 261120
    %v100 = vsel %vm98, %v81, 0
    %102 = vmatprep.subr.bf16.mxu0 0
    %103 = vmatpush1.bf16.msra.mxu0 %v94
    %104 = vmatprep.subr.bf16.mxu0 0
    %105 = vmatpush1.bf16.msra.mxu0 %v95
    %106 = vmatprep.subr.bf16.mxu0 0
    %107 = vmatpush1.bf16.msra.mxu0 0
    %108 = vmatprep.subr.bf16.mxu0 0
    %109 = vmatpush1.bf16.msra.mxu0 0
    %110 = vmatprep.subr.bf16.mxu0 0
    %111 = vmatpush1.bf16.msra.mxu0 0
    %112 = vmatprep.subr.bf16.mxu0 0
    %113 = vmatpush1.bf16.msra.mxu0 0
    %114 = vmatprep.subr.bf16.mxu0 0
    %115 = vmatpush1.bf16.msra.mxu0 0
    %116 = vmatprep.subr.bf16.mxu0 0
    %117 = vmatpush1.bf16.msra.mxu0 0
    %118 = vmatprep.subr.bf16.mxu0 0
    %119 = vmatpush1.bf16.msra.mxu0 0
    %120 = vmatprep.subr.bf16.mxu0 0
    %121 = vmatpush1.bf16.msra.mxu0 0
    %122 = vmatprep.subr.bf16.mxu0 0
    %123 = vmatpush1.bf16.msra.mxu0 0
    %124 = vmatprep.subr.bf16.mxu0 0
    %125 = vmatpush1.bf16.msra.mxu0 0
    %126 = vmatprep.subr.bf16.mxu0 0
    %127 = vmatpush1.bf16.msra.mxu0 0
    %128 = vmatprep.subr.bf16.mxu0 0
    %129 = vmatpush1.bf16.msra.mxu0 0
    %130 = vmatprep.subr.bf16.mxu0 0
    %131 = vmatpush1.bf16.msra.mxu0 0
    %132 = vmatprep.subr.bf16.mxu0 0
    %133 = vmatpush1.bf16.msra.mxu0 0
    %134 = vmatprep.mubr.bf16.mxu0 0
    %135 = vmatmul.mubr.bf16.gmra.mrb[0].mxu0 %v100
    %v136 = vpop.f32.mrb[0].mxu0
    %v137 = vadd.f32 %v85, %v136
    %v138 = vpop.f32.mrb[0].mxu0
    %v139 = vpop.f32.mrb[0].mxu0
    %v140 = vpop.f32.mrb[0].mxu0
    %141 = vdwg.mxu0
    %v142 = vmax.f32 %v137, 0.0
    %v143 = vld [vmem:[#allocation7] sm:$0xf]
    %v144 = vld [vmem:[#allocation7 + $0x4] sm:$0xf]
    %v145 = vld [vmem:[#allocation7 + $0x8] sm:$0xf]
    %v146 = vld [vmem:[#allocation7 + $0xc] sm:$0xf]
    %v147 = vld [vmem:[#allocation7 + $0x10] sm:$0xf]
    %v148 = vld [vmem:[#allocation7 + $0x14] sm:$0xf]
    %v149 = vld [vmem:[#allocation7 + $0x18] sm:$0xf]
    %v150 = vld [vmem:[#allocation7 + $0x1c] sm:$0xf]
    %v151 = vld [vmem:[#allocation7 + $0x20] sm:$0xf]
    %v152 = vld [vmem:[#allocation7 + $0x24] sm:$0xf]
    %v153 = vld [vmem:[#allocation7 + $0x28] sm:$0xf]
    %v154 = vld [vmem:[#allocation7 + $0x2c] sm:$0xf]
    %v155 = vld [vmem:[#allocation7 + $0x30] sm:$0xf]
    %v156 = vld [vmem:[#allocation7 + $0x34] sm:$0xf]
    %v157 = vld [vmem:[#allocation7 + $0x38] sm:$0xf]
    %v158 = vld [vmem:[#allocation7 + $0x3c] sm:$0xf]
    %v159 = vld [vmem:[%s4 + $0x1] sm:$0x1]
    %v160 = vpack.c.bf16 %v142, %v142
    %v161 = vlaneseq
    %v162 = vshrl.u32 %v161, 7
    %v163 = vsub.s32 0, %v162
    %v164 = vrot.slane %v159, %v163
    %v181 = vunpack.c.l.b16 %v143
    %v182 = vunpack.c.l.b16 %v144
    %v183 = vunpack.c.l.b16 %v145
    %v184 = vunpack.c.l.b16 %v146
    %v185 = vunpack.c.l.b16 %v147
    %v186 = vunpack.c.l.b16 %v148
    %v187 = vunpack.c.l.b16 %v149
    %v188 = vunpack.c.l.b16 %v150
    %v189 = vunpack.c.l.b16 %v151
    %v190 = vunpack.c.l.b16 %v152
    %v191 = vunpack.c.l.b16 %v153
    %v192 = vunpack.c.l.b16 %v154
    %v193 = vunpack.c.l.b16 %v155
    %v194 = vunpack.c.l.b16 %v156
    %v195 = vunpack.c.l.b16 %v157
    %v196 = vunpack.c.l.b16 %v158
    %v197 = vpack.c.b16 %v182, %v181
    %v198 = vpack.c.b16 %v184, %v183
    %v199 = vpack.c.b16 %v186, %v185
    %v200 = vpack.c.b16 %v188, %v187
    %v201 = vpack.c.b16 %v190, %v189
    %v202 = vpack.c.b16 %v192, %v191
    %v203 = vpack.c.b16 %v194, %v193
    %v204 = vpack.c.b16 %v196, %v195
    %213 = vmatprep.subr.bf16.mxu0 0
    %214 = vmatpush1.bf16.msra.mxu0 %v197
    %215 = vmatprep.subr.bf16.mxu0 0
    %216 = vmatpush1.bf16.msra.mxu0 %v198
    %217 = vmatprep.subr.bf16.mxu0 0
    %218 = vmatpush1.bf16.msra.mxu0 %v199
    %219 = vmatprep.subr.bf16.mxu0 0
    %220 = vmatpush1.bf16.msra.mxu0 %v200
    %221 = vmatprep.subr.bf16.mxu0 0
    %222 = vmatpush1.bf16.msra.mxu0 %v201
    %223 = vmatprep.subr.bf16.mxu0 0
    %224 = vmatpush1.bf16.msra.mxu0 %v202
    %225 = vmatprep.subr.bf16.mxu0 0
    %226 = vmatpush1.bf16.msra.mxu0 %v203
    %227 = vmatprep.subr.bf16.mxu0 0
    %228 = vmatpush1.bf16.msra.mxu0 %v204
    %229 = vmatprep.subr.bf16.mxu0 0
    %230 = vmatpush1.bf16.msra.mxu0 0
    %231 = vmatprep.subr.bf16.mxu0 0
    %232 = vmatpush1.bf16.msra.mxu0 0
    %233 = vmatprep.subr.bf16.mxu0 0
    %234 = vmatpush1.bf16.msra.mxu0 0
    %235 = vmatprep.subr.bf16.mxu0 0
    %236 = vmatpush1.bf16.msra.mxu0 0
    %237 = vmatprep.subr.bf16.mxu0 0
    %238 = vmatpush1.bf16.msra.mxu0 0
    %239 = vmatprep.subr.bf16.mxu0 0
    %240 = vmatpush1.bf16.msra.mxu0 0
    %241 = vmatprep.subr.bf16.mxu0 0
    %242 = vmatpush1.bf16.msra.mxu0 0
    %243 = vmatprep.subr.bf16.mxu0 0
    %244 = vmatpush1.bf16.msra.mxu0 0
    %245 = vmatprep.mubr.bf16.mxu0 0
    %246 = vmatmul.mubr.bf16.gmra.mrb[0].mxu0 %v160
    %v247 = vpop.f32.mrb[0].mxu0
    %v248 = vadd.f32 %v164, %v247
    %v249 = vpop.f32.mrb[0].mxu0
    %v250 = vpop.f32.mrb[0].mxu0
    %v251 = vpop.f32.mrb[0].mxu0
    %252 = vdwg.mxu0
    %v253 = vmax.f32 %v248, 0.0
    %v254 = vld [vmem:[#allocation8] sm:$0xf]
    %v255 = vld [vmem:[#allocation8 + $0x4] sm:$0xf]
    %v256 = vld [vmem:[#allocation8 + $0x8] sm:$0xf]
    %v257 = vld [vmem:[#allocation8 + $0xc] sm:$0xf]
    %v258 = vld [vmem:[#allocation8 + $0x10] sm:$0xf]
    %v259 = vld [vmem:[#allocation8 + $0x14] sm:$0xf]
    %v260 = vld [vmem:[#allocation8 + $0x18] sm:$0xf]
    %v261 = vld [vmem:[#allocation8 + $0x1c] sm:$0xf]
    %v262 = vld [vmem:[#allocation8 + $0x20] sm:$0xf]
    %v263 = vld [vmem:[#allocation8 + $0x24] sm:$0xf]
    %v264 = vld [vmem:[#allocation8 + $0x28] sm:$0xf]
    %v265 = vld [vmem:[#allocation8 + $0x2c] sm:$0xf]
    %v266 = vld [vmem:[#allocation8 + $0x30] sm:$0xf]
    %v267 = vld [vmem:[#allocation8 + $0x34] sm:$0xf]
    %v268 = vld [vmem:[#allocation8 + $0x38] sm:$0xf]
    %v269 = vld [vmem:[#allocation8 + $0x3c] sm:$0xf]
    %v270 = vld [vmem:[%s4 + $0x2] sm:$0x1]
    %v271 = vpack.c.bf16 %v253, %v253
    %v272 = vlaneseq
    %v273 = vshrl.u32 %v272, 7
    %v274 = vsub.s32 0, %v273
    %v275 = vrot.slane %v270, %v274
    %v292 = vunpack.c.l.b16 %v254
    %v293 = vunpack.c.l.b16 %v255
    %v294 = vunpack.c.l.b16 %v256
    %v295 = vunpack.c.l.b16 %v257
    %v296 = vunpack.c.l.b16 %v258
    %v297 = vunpack.c.l.b16 %v259
    %v298 = vunpack.c.l.b16 %v260
    %v299 = vunpack.c.l.b16 %v261
    %v300 = vunpack.c.l.b16 %v262
    %v301 = vunpack.c.l.b16 %v263
    %v302 = vunpack.c.l.b16 %v264
    %v303 = vunpack.c.l.b16 %v265
    %v304 = vunpack.c.l.b16 %v266
    %v305 = vunpack.c.l.b16 %v267
    %v306 = vunpack.c.l.b16 %v268
    %v307 = vunpack.c.l.b16 %v269
    %v308 = vpack.c.b16 %v293, %v292
    %v309 = vpack.c.b16 %v295, %v294
    %v310 = vpack.c.b16 %v297, %v296
    %v311 = vpack.c.b16 %v299, %v298
    %v312 = vpack.c.b16 %v301, %v300
    %v313 = vpack.c.b16 %v303, %v302
    %v314 = vpack.c.b16 %v305, %v304
    %v315 = vpack.c.b16 %v307, %v306
    %324 = vmatprep.subr.bf16.mxu0 0
    %325 = vmatpush1.bf16.msra.mxu0 %v308
    %326 = vmatprep.subr.bf16.mxu0 0
    %327 = vmatpush1.bf16.msra.mxu0 %v309
    %328 = vmatprep.subr.bf16.mxu0 0
    %329 = vmatpush1.bf16.msra.mxu0 %v310
    %330 = vmatprep.subr.bf16.mxu0 0
    %331 = vmatpush1.bf16.msra.mxu0 %v311
    %332 = vmatprep.subr.bf16.mxu0 0
    %333 = vmatpush1.bf16.msra.mxu0 %v312
    %334 = vmatprep.subr.bf16.mxu0 0
    %335 = vmatpush1.bf16.msra.mxu0 %v313
    %336 = vmatprep.subr.bf16.mxu0 0
    %337 = vmatpush1.bf16.msra.mxu0 %v314
    %338 = vmatprep.subr.bf16.mxu0 0
    %339 = vmatpush1.bf16.msra.mxu0 %v315
    %340 = vmatprep.subr.bf16.mxu0 0
    %341 = vmatpush1.bf16.msra.mxu0 0
    %342 = vmatprep.subr.bf16.mxu0 0
    %343 = vmatpush1.bf16.msra.mxu0 0
    %344 = vmatprep.subr.bf16.mxu0 0
    %345 = vmatpush1.bf16.msra.mxu0 0
    %346 = vmatprep.subr.bf16.mxu0 0
    %347 = vmatpush1.bf16.msra.mxu0 0
    %348 = vmatprep.subr.bf16.mxu0 0
    %349 = vmatpush1.bf16.msra.mxu0 0
    %350 = vmatprep.subr.bf16.mxu0 0
    %351 = vmatpush1.bf16.msra.mxu0 0
    %352 = vmatprep.subr.bf16.mxu0 0
    %353 = vmatpush1.bf16.msra.mxu0 0
    %354 = vmatprep.subr.bf16.mxu0 0
    %355 = vmatpush1.bf16.msra.mxu0 0
    %356 = vmatprep.mubr.bf16.mxu0 0
    %357 = vmatmul.mubr.bf16.gmra.mrb[0].mxu0 %v271
    %v358 = vpop.f32.mrb[0].mxu0
    %v359 = vadd.f32 %v275, %v358
    %v360 = vpop.f32.mrb[0].mxu0
    %v361 = vpop.f32.mrb[0].mxu0
    %v362 = vpop.f32.mrb[0].mxu0
    %363 = vdwg.mxu0
    %364 = vst [vmem:[#allocation10] sm:$0xff] %v359
    // Predicated region
    $region38: #{_forward_impl.1} parent=1 // pred_check
      _
    $region39: #{_forward_impl.1} parent=1 // pred_check_branch
      %366 = sbr.rel (0) target = $region41
    $region40: #{_forward_impl.1} parent=1 // pred_region
      %s368 = ssub.s32 128, 128
      %369 = vsyncadd [#allocation4], %s368
      %s371 = sshll.u32 [#allocation10], 4
      %s372 = int_to_ptr.vmem [resolvable:$true] %s371
      %374 = dma.vmem_to_hbm [thread:$0]  %s372, 128, %s5, [#allocation4]
    $region41: #{_forward_impl.1} parent=1 // pred_fallthru
      _
    // Predicated region
    $region42: #{_forward_impl.1} parent=1 // pred_check
      _
    $region43: #{_forward_impl.1} parent=1 // pred_check_branch
      %376 = sbr.rel (0) target = $region45
    $region44: #{_forward_impl.1} parent=1 // pred_region
      %377 = dma.done [#allocation4], 128
    $region45: #{_forward_impl.1} parent=1 // pred_fallthru
      _
    %378 = vsyncpa [#allocation3], 1
    %379 = vsyncpa [#allocation6], 1
    %380 = vsyncpa [#allocation9], 1
    %381 = vsyncpa [#allocation4], 1

</llo_original>
